<compile_context>
chip_gen: v6e
topology: v6e:2x2x1
jax: 0.10.0
libtpu: 0.0.40
codegen_flags: <defaults>
</compile_context>

<pallas_src>
import jax
import jax.numpy as jnp
from jax.experimental import pallas as pl
from jax.experimental.pallas import tpu as pltpu

HIDDEN = 256
DEFAULT_BLOCK_B = 512   # batch tile; comfortably within VMEM even on v7x


def _round_up(x, m):
    return ((x + m - 1) // m) * m


def qnet_kernel(s_ref, a_ref, w1s_ref, w1a_ref, b1_ref, w2_ref, b2_ref,
                w3_ref, b3_ref, o_ref):
    # Layer 1: fused concat -> split-weight matmuls. bf16 operands, f32 acc.
    h1 = (jnp.dot(s_ref[...], w1s_ref[...], preferred_element_type=jnp.float32)
          + jnp.dot(a_ref[...], w1a_ref[...], preferred_element_type=jnp.float32)
          + b1_ref[...])
    h1 = jnp.maximum(h1, 0.0)                                    # ReLU in f32

    # Layer 2: 256x256 bf16 matmul, f32 accumulate; bias/ReLU in f32.
    h2 = jnp.dot(h1.astype(jnp.bfloat16), w2_ref[...],
                 preferred_element_type=jnp.float32) + b2_ref[...]
    h2 = jnp.maximum(h2, 0.0)

    # Layer 3 (256 -> 1): VPU multiply + lane reduction instead of an N=1
    # matmul that would waste the MXU.  w3 is a [1, 256] f32 row.
    q = jnp.sum(h2 * w3_ref[...], axis=-1, keepdims=True) + b3_ref[...]
    o_ref[...] = q.astype(o_ref.dtype)


def qnetwork_forward(state, action, params, *, block_b=DEFAULT_BLOCK_B):
    """Pallas implementation of QNetwork.forward(state, action) -> [B, 1]."""
    w1s, w1a, b1, w2, b2, w3, b3 = params
    B, S = state.shape
    A = action.shape[1]

    # Batch tile: multiple of 8 sublanes, capped at block_b; pad B up to it.
    tb = min(block_b, _round_up(B, 8))
    b_pad = _round_up(B, tb)
    if b_pad != B:
        state = jnp.pad(state, ((0, b_pad - B), (0, 0)))
        action = jnp.pad(action, ((0, b_pad - B), (0, 0)))

    # bf16 operands for the MXU; biases / final head row stay f32.
    bf16 = jnp.bfloat16
    state = state.astype(bf16)
    action = action.astype(bf16)
    w1s = w1s.astype(bf16)
    w1a = w1a.astype(bf16)
    w2 = w2.astype(bf16)

    # Weights/biases: constant index_map -> fetched once, resident in VMEM.
    resident = lambda shape: pl.BlockSpec(shape, lambda i: (0,) * len(shape))

    out = pl.pallas_call(
        qnet_kernel,
        out_shape=jax.ShapeDtypeStruct((b_pad, 1), jnp.float32),
        grid=(b_pad // tb,),
        in_specs=[
            pl.BlockSpec((tb, S), lambda i: (i, 0)),   # state tile (streamed)
            pl.BlockSpec((tb, A), lambda i: (i, 0)),   # action tile (streamed)
            resident((S, HIDDEN)),                     # W1s
            resident((A, HIDDEN)),                     # W1a
            resident((1, HIDDEN)),                     # b1
            resident((HIDDEN, HIDDEN)),                # W2
            resident((1, HIDDEN)),                     # b2
            resident((1, HIDDEN)),                     # W3 (as a row)
            resident((1, 1)),                          # b3
        ],
        out_specs=pl.BlockSpec((tb, 1), lambda i: (i, 0)),
        compiler_params=pltpu.CompilerParams(
            dimension_semantics=("parallel",),         # megacore-shard the batch
        ),
    )(state, action, w1s, w1a, b1, w2, b2, w3, b3)
    return out[:B]


def init_qnetwork_params(key, state_dim, action_dim, init_weight=0.01):
    """Init matching the PyTorch module's uniform_ calls.

    Weights ~ U(-init_weight, init_weight), biases ~ U(0, init_weight).
    W1 is stored pre-split ([state_dim,256] and [action_dim,256]); W3 is the
    [1,256] row (same layout as nn.Linear(256,1).weight)."""
    k = jax.random.split(key, 7)
    w1s = jax.random.uniform(k[0], (state_dim, HIDDEN), jnp.float32, -init_weight, init_weight)
    w1a = jax.random.uniform(k[1], (action_dim, HIDDEN), jnp.float32, -init_weight, init_weight)
    b1 = jax.random.uniform(k[2], (1, HIDDEN), jnp.float32, 0.0, init_weight)
    w2 = jax.random.uniform(k[3], (HIDDEN, HIDDEN), jnp.float32, -init_weight, init_weight)
    b2 = jax.random.uniform(k[4], (1, HIDDEN), jnp.float32, 0.0, init_weight)
    w3 = jax.random.uniform(k[5], (1, HIDDEN), jnp.float32, -init_weight, init_weight)
    b3 = jax.random.uniform(k[6], (1, 1), jnp.float32, 0.0, init_weight)
    return (w1s, w1a, b1, w2, b2, w3, b3)


def qnetwork_ref(state, action, params):
    """Plain-JAX f32 reference of the PyTorch forward."""
    w1s, w1a, b1, w2, b2, w3, b3 = params
    x = jnp.concatenate([state, action], axis=-1)
    w1 = jnp.concatenate([w1s, w1a], axis=0)
    h1 = jnp.maximum(x @ w1 + b1, 0.0)
    h2 = jnp.maximum(h1 @ w2 + b2, 0.0)
    return h2 @ w3.T + b3


def qnetwork_ref_bf16(state, action, params):
    """Reference with the same bf16-operand / f32-accumulation casts as the kernel."""
    w1s, w1a, b1, w2, b2, w3, b3 = params
    bf = jnp.bfloat16
    h1 = (jnp.dot(state.astype(bf), w1s.astype(bf), preferred_element_type=jnp.float32)
          + jnp.dot(action.astype(bf), w1a.astype(bf), preferred_element_type=jnp.float32)
          + b1)
    h1 = jnp.maximum(h1, 0.0)
    h2 = jnp.dot(h1.astype(bf), w2.astype(bf), preferred_element_type=jnp.float32) + b2
    h2 = jnp.maximum(h2, 0.0)
    return jnp.sum(h2 * w3, axis=-1, keepdims=True) + b3


if __name__ == "__main__":
    key = jax.random.PRNGKey(0)
    state_dim, action_dim = 11, 3          # e.g. Hopper-v3 sizes

    kp, ks, ka = jax.random.split(key, 3)
    params = init_qnetwork_params(kp, state_dim, action_dim, init_weight=0.01)

    # Small batch: single grid step.
    batch = 8
    state = jax.random.normal(ks, (batch, state_dim), jnp.float32)
    action = jax.random.normal(ka, (batch, action_dim), jnp.float32)
    q = jax.block_until_ready(qnetwork_forward(state, action, params))
    assert q.shape == (batch, 1)
    assert jnp.allclose(q, qnetwork_ref_bf16(state, action, params), atol=1e-4, rtol=1e-3)
    assert jnp.allclose(q, qnetwork_ref(state, action, params), atol=2e-3, rtol=5e-2)

    # Non-multiple batch with a multi-step grid (exercises padding, pipelining,
    # and weight residency across grid steps).
    batch2 = 300
    ks2, ka2 = jax.random.split(jax.random.PRNGKey(1))
    state2 = jax.random.normal(ks2, (batch2, state_dim), jnp.float32)
    action2 = jax.random.normal(ka2, (batch2, action_dim), jnp.float32)
    q2 = jax.block_until_ready(qnetwork_forward(state2, action2, params, block_b=128))
    assert q2.shape == (batch2, 1)
    assert jnp.allclose(q2, qnetwork_ref_bf16(state2, action2, params), atol=1e-4, rtol=1e-3)

    print("KERNEL_OK")
</pallas_src>

<mosaic_0001>
module attributes {stable_mosaic.version = 11 : i64} {
  func.func @qnet_kernel(%arg0: i32, %arg1: memref<8x11xbf16, #tpu.memory_space<vmem>>, %arg2: memref<8x3xbf16, #tpu.memory_space<vmem>>, %arg3: memref<11x256xbf16, #tpu.memory_space<vmem>>, %arg4: memref<3x256xbf16, #tpu.memory_space<vmem>>, %arg5: memref<1x256xf32, #tpu.memory_space<vmem>>, %arg6: memref<256x256xbf16, #tpu.memory_space<vmem>>, %arg7: memref<1x256xf32, #tpu.memory_space<vmem>>, %arg8: memref<1x256xf32, #tpu.memory_space<vmem>>, %arg9: memref<1x1xf32, #tpu.memory_space<vmem>>, %arg10: memref<8x1xf32, #tpu.memory_space<vmem>>) attributes {dimension_semantics = [#tpu.dimension_semantics<parallel>], iteration_bounds = array<i64: 1>, scalar_prefetch = 0 : i64, scratch_operands = 0 : i64, tpu.core_type = #tpu.core_type<tc>, window_params = [{transform_indices = @transform_0, window_bounds = array<i64: 8, 11>}, {transform_indices = @transform_1, window_bounds = array<i64: 8, 3>}, {pipeline_mode = #tpu.pipeline_mode<synchronous>, transform_indices = @transform_2, window_bounds = array<i64: 11, 256>}, {pipeline_mode = #tpu.pipeline_mode<synchronous>, transform_indices = @transform_3, window_bounds = array<i64: 3, 256>}, {pipeline_mode = #tpu.pipeline_mode<synchronous>, transform_indices = @transform_4, window_bounds = array<i64: 1, 256>}, {pipeline_mode = #tpu.pipeline_mode<synchronous>, transform_indices = @transform_5, window_bounds = array<i64: 256, 256>}, {pipeline_mode = #tpu.pipeline_mode<synchronous>, transform_indices = @transform_6, window_bounds = array<i64: 1, 256>}, {pipeline_mode = #tpu.pipeline_mode<synchronous>, transform_indices = @transform_7, window_bounds = array<i64: 1, 256>}, {pipeline_mode = #tpu.pipeline_mode<synchronous>, transform_indices = @transform_8, window_bounds = array<i64: 1, 1>}, {transform_indices = @transform_9, window_bounds = array<i64: 8, 1>}]} {
    %c0 = arith.constant 0 : index
    %c0_0 = arith.constant 0 : index
    %0 = vector.load %arg1[%c0, %c0_0] : memref<8x11xbf16, #tpu.memory_space<vmem>>, vector<8x11xbf16>
    %c0_1 = arith.constant 0 : index
    %c0_2 = arith.constant 0 : index
    %1 = vector.load %arg3[%c0_1, %c0_2] : memref<11x256xbf16, #tpu.memory_space<vmem>>, vector<11x256xbf16>
    %cst = arith.constant dense<0.000000e+00> : vector<8x256xf32>
    %2 = tpu.matmul %0, %1, %cst {dimension_numbers = #tpu.dot_dimension_numbers<[1], [0], [0], [1], [0, 0, 1, 1], [], []>} : vector<8x11xbf16>, vector<11x256xbf16>, vector<8x256xf32> -> vector<8x256xf32>
    %c0_3 = arith.constant 0 : index
    %c0_4 = arith.constant 0 : index
    %3 = vector.load %arg2[%c0_3, %c0_4] : memref<8x3xbf16, #tpu.memory_space<vmem>>, vector<8x3xbf16>
    %c0_5 = arith.constant 0 : index
    %c0_6 = arith.constant 0 : index
    %4 = vector.load %arg4[%c0_5, %c0_6] : memref<3x256xbf16, #tpu.memory_space<vmem>>, vector<3x256xbf16>
    %cst_7 = arith.constant dense<0.000000e+00> : vector<8x256xf32>
    %5 = tpu.matmul %3, %4, %cst_7 {dimension_numbers = #tpu.dot_dimension_numbers<[1], [0], [0], [1], [0, 0, 1, 1], [], []>} : vector<8x3xbf16>, vector<3x256xbf16>, vector<8x256xf32> -> vector<8x256xf32>
    %6 = arith.addf %2, %5 : vector<8x256xf32>
    %c0_8 = arith.constant 0 : index
    %c0_9 = arith.constant 0 : index
    %7 = vector.load %arg5[%c0_8, %c0_9] : memref<1x256xf32, #tpu.memory_space<vmem>>, vector<1x256xf32>
    %8 = vector.broadcast %7 : vector<1x256xf32> to vector<8x256xf32>
    %9 = arith.addf %6, %8 : vector<8x256xf32>
    %cst_10 = arith.constant 0.000000e+00 : f32
    %10 = vector.broadcast %cst_10 : f32 to vector<8x256xf32>
    %11 = arith.maximumf %9, %10 : vector<8x256xf32>
    %12 = arith.truncf %11 : vector<8x256xf32> to vector<8x256xbf16>
    %c0_11 = arith.constant 0 : index
    %c0_12 = arith.constant 0 : index
    %13 = vector.load %arg6[%c0_11, %c0_12] : memref<256x256xbf16, #tpu.memory_space<vmem>>, vector<256x256xbf16>
    %cst_13 = arith.constant dense<0.000000e+00> : vector<8x256xf32>
    %14 = tpu.matmul %12, %13, %cst_13 {dimension_numbers = #tpu.dot_dimension_numbers<[1], [0], [0], [1], [0, 0, 1, 1], [], []>} : vector<8x256xbf16>, vector<256x256xbf16>, vector<8x256xf32> -> vector<8x256xf32>
    %c0_14 = arith.constant 0 : index
    %c0_15 = arith.constant 0 : index
    %15 = vector.load %arg7[%c0_14, %c0_15] : memref<1x256xf32, #tpu.memory_space<vmem>>, vector<1x256xf32>
    %16 = vector.broadcast %15 : vector<1x256xf32> to vector<8x256xf32>
    %17 = arith.addf %14, %16 : vector<8x256xf32>
    %cst_16 = arith.constant 0.000000e+00 : f32
    %18 = vector.broadcast %cst_16 : f32 to vector<8x256xf32>
    %19 = arith.maximumf %17, %18 : vector<8x256xf32>
    %c0_17 = arith.constant 0 : index
    %c0_18 = arith.constant 0 : index
    %20 = vector.load %arg8[%c0_17, %c0_18] : memref<1x256xf32, #tpu.memory_space<vmem>>, vector<1x256xf32>
    %21 = vector.broadcast %20 : vector<1x256xf32> to vector<8x256xf32>
    %22 = arith.mulf %19, %21 : vector<8x256xf32>
    %cst_19 = arith.constant dense<0.000000e+00> : vector<8xf32>
    %23 = vector.multi_reduction <add>, %22, %cst_19 [1] : vector<8x256xf32> to vector<8xf32>
    %24 = vector.shape_cast %23 : vector<8xf32> to vector<8x1xf32>
    %c0_20 = arith.constant 0 : index
    %c0_21 = arith.constant 0 : index
    %25 = vector.load %arg9[%c0_20, %c0_21] : memref<1x1xf32, #tpu.memory_space<vmem>>, vector<1x1xf32>
    %26 = vector.broadcast %25 : vector<1x1xf32> to vector<8x1xf32>
    %27 = arith.addf %24, %26 : vector<8x1xf32>
    %c0_22 = arith.constant 0 : index
    %c0_23 = arith.constant 0 : index
    %28 = vector.load %arg10[%c0_22, %c0_23] : memref<8x1xf32, #tpu.memory_space<vmem>>, vector<8x1xf32>
    tpu.vector_store %arg10[%c0_22, %c0_23], %27 {strides = array<i32>} : memref<8x1xf32, #tpu.memory_space<vmem>>, vector<8x1xf32>,
    return
  }
  func.func @transform_0(%arg0: i32) -> (i32, i32) {
    %c0_i32 = arith.constant 0 : i32
    %c0_i32_0 = arith.constant 0 : i32
    return %arg0, %c0_i32 : i32, i32
  }
  func.func @transform_1(%arg0: i32) -> (i32, i32) {
    %c0_i32 = arith.constant 0 : i32
    %c0_i32_0 = arith.constant 0 : i32
    return %arg0, %c0_i32 : i32, i32
  }
  func.func @transform_2(%arg0: i32) -> (i32, i32) {
    %c0_i32 = arith.constant 0 : i32
    %c0_i32_0 = arith.constant 0 : i32
    %c0_i32_1 = arith.constant 0 : i32
    return %c0_i32, %c0_i32_0 : i32, i32
  }
  func.func @transform_3(%arg0: i32) -> (i32, i32) {
    %c0_i32 = arith.constant 0 : i32
    %c0_i32_0 = arith.constant 0 : i32
    %c0_i32_1 = arith.constant 0 : i32
    return %c0_i32, %c0_i32_0 : i32, i32
  }
  func.func @transform_4(%arg0: i32) -> (i32, i32) {
    %c0_i32 = arith.constant 0 : i32
    %c0_i32_0 = arith.constant 0 : i32
    %c0_i32_1 = arith.constant 0 : i32
    return %c0_i32, %c0_i32_0 : i32, i32
  }
  func.func @transform_5(%arg0: i32) -> (i32, i32) {
    %c0_i32 = arith.constant 0 : i32
    %c0_i32_0 = arith.constant 0 : i32
    %c0_i32_1 = arith.constant 0 : i32
    return %c0_i32, %c0_i32_0 : i32, i32
  }
  func.func @transform_6(%arg0: i32) -> (i32, i32) {
    %c0_i32 = arith.constant 0 : i32
    %c0_i32_0 = arith.constant 0 : i32
    %c0_i32_1 = arith.constant 0 : i32
    return %c0_i32, %c0_i32_0 : i32, i32
  }
  func.func @transform_7(%arg0: i32) -> (i32, i32) {
    %c0_i32 = arith.constant 0 : i32
    %c0_i32_0 = arith.constant 0 : i32
    %c0_i32_1 = arith.constant 0 : i32
    return %c0_i32, %c0_i32_0 : i32, i32
  }
  func.func @transform_8(%arg0: i32) -> (i32, i32) {
    %c0_i32 = arith.constant 0 : i32
    %c0_i32_0 = arith.constant 0 : i32
    %c0_i32_1 = arith.constant 0 : i32
    return %c0_i32, %c0_i32_0 : i32, i32
  }
  func.func @transform_9(%arg0: i32) -> (i32, i32) {
    %c0_i32 = arith.constant 0 : i32
    %c0_i32_0 = arith.constant 0 : i32
    return %arg0, %c0_i32 : i32, i32
  }
}

</mosaic_0001>

<llo_original>
// kernel: tpu_custom_call.1
$region0: #{tpu_custom_call.1}
  #allocation0 [shape = 'u32[]', space=smem, size = 0x4, offset = 0x4, fixed_abs, tag = 'smem constant byte address 0x4 - core index']
  #allocation1 [shape = 'u32[144,128]{1,0:T(1,128)}', space=vmem, size = 0x12000, scoped, tag = 'internal scratch']
  #allocation2 [shape = 'f32[1,1]{1,0:T(1,128)S(1)}', space=vmem, size = 0x200, scoped, tag = 'scoped memory for tpu_custom_call.1']
  %s0 = inlined_call_operand.vmem [shape: bf16[8,11], index: 0, kind: input, shape index: {}]
  %s1 = inlined_call_operand.vmem [shape: bf16[8,3], index: 1, kind: input, shape index: {}]
  %s2 = inlined_call_operand.hbm [shape: bf16[11,256], index: 2, kind: input, shape index: {}]
  %s3 = inlined_call_operand.vmem [shape: bf16[3,256], index: 3, kind: input, shape index: {}]
  %s4 = inlined_call_operand.vmem [shape: f32[1,256], index: 4, kind: input, shape index: {}]
  %s5 = inlined_call_operand.hbm [shape: bf16[256,256], index: 5, kind: input, shape index: {}]
  %s6 = inlined_call_operand.vmem [shape: f32[1,256], index: 6, kind: input, shape index: {}]
  %s7 = inlined_call_operand.vmem [shape: f32[1,256], index: 7, kind: input, shape index: {}]
  %s8 = inlined_call_operand.<no memory space> [shape: f32[1,1], index: 8, kind: input, shape index: {}]
  %s9 = inlined_call_operand.vmem [shape: f32[8,1], index: 9, kind: output, shape index: {}]
  %s10 = sld [smem:[#allocation0]]
  $region54: #{tpu_custom_call.1} parent=0
    _
  %s12 = ssub.s32 1, %s10
  %s13 = scalar_select 0, %s12, %s10
  %v14 = vstv %s8
  %15 = vst [vmem:[#allocation2] sm:$0x1] %v14
  $region1: #{tpu_custom_call.1} parent=0
    #allocation3 [shape = 'u8[8192]{0}', space=vmem, size = 0x2000, scoped, tag = 'input window, operand 2, single buffered']
    #allocation4 [shape = 's32[1]{0}', space=sflag, size = 0x4, scoped, tag = 'scoped memory for tpu_custom_call.1']
    #allocation5 [shape = 'u8[131072]{0}', space=vmem, size = 0x20000, scoped, tag = 'input window, operand 5, single buffered']
    #allocation6 [shape = 's32[1]{0}', space=sflag, size = 0x4, scoped, tag = 'scoped memory for tpu_custom_call.1']
    %16 = vsyncpa [#allocation4], 0
    %17 = vsyncpa [#allocation6], 0
    // Predicated region
    $region2: #{tpu_custom_call.1} parent=1 // pred_check
      _
    $region3: #{tpu_custom_call.1} parent=1 // pred_check_branch
      %19 = sbr.rel (0) target = $region5
    $region4: #{tpu_custom_call.1} parent=1 // pred_region
      _
    $region5: #{tpu_custom_call.1} parent=1 // pred_fallthru
      _
    // Predicated region
    $region6: #{tpu_custom_call.1} parent=1 // pred_check
      _
    $region7: #{tpu_custom_call.1} parent=1 // pred_check_branch
      %21 = sbr.rel (0) target = $region9
    $region8: #{tpu_custom_call.1} parent=1 // pred_region
      _
    $region9: #{tpu_custom_call.1} parent=1 // pred_fallthru
      _
    // Predicated region
    $region10: #{tpu_custom_call.1} parent=1 // pred_check
      _
    $region11: #{tpu_custom_call.1} parent=1 // pred_check_branch
      %23 = sbr.rel (0) target = $region13
    $region12: #{tpu_custom_call.1} parent=1 // pred_region
      %s25 = ssub.s32 256, 256
      %26 = vsyncadd [#allocation4], %s25
      %s27 = sshll.u32 [#allocation3], 4
      %s28 = int_to_ptr.vmem [resolvable:$true] %s27
      %33 = dma.hbm_to_vmem [thread:$0]  %s2, 256, %s28, [#allocation4], 128, 128, 8
    $region13: #{tpu_custom_call.1} parent=1 // pred_fallthru
      _
    // Predicated region
    $region14: #{tpu_custom_call.1} parent=1 // pred_check
      _
    $region15: #{tpu_custom_call.1} parent=1 // pred_check_branch
      %35 = sbr.rel (0) target = $region17
    $region16: #{tpu_custom_call.1} parent=1 // pred_region
      _
    $region17: #{tpu_custom_call.1} parent=1 // pred_fallthru
      _
    // Predicated region
    $region18: #{tpu_custom_call.1} parent=1 // pred_check
      _
    $region19: #{tpu_custom_call.1} parent=1 // pred_check_branch
      %37 = sbr.rel (0) target = $region21
    $region20: #{tpu_custom_call.1} parent=1 // pred_region
      _
    $region21: #{tpu_custom_call.1} parent=1 // pred_fallthru
      _
    // Predicated region
    $region22: #{tpu_custom_call.1} parent=1 // pred_check
      _
    $region23: #{tpu_custom_call.1} parent=1 // pred_check_branch
      %39 = sbr.rel (0) target = $region25
    $region24: #{tpu_custom_call.1} parent=1 // pred_region
      %s41 = ssub.s32 4096, 4096
      %42 = vsyncadd [#allocation6], %s41
      %s43 = sshll.u32 [#allocation5], 4
      %s44 = int_to_ptr.vmem [resolvable:$true] %s43
      %49 = dma.hbm_to_vmem [thread:$0]  %s5, 4096, %s44, [#allocation6], 128, 128, 8
    $region25: #{tpu_custom_call.1} parent=1 // pred_fallthru
      _
    // Predicated region
    $region26: #{tpu_custom_call.1} parent=1 // pred_check
      _
    $region27: #{tpu_custom_call.1} parent=1 // pred_check_branch
      %51 = sbr.rel (0) target = $region29
    $region28: #{tpu_custom_call.1} parent=1 // pred_region
      _
    $region29: #{tpu_custom_call.1} parent=1 // pred_fallthru
      _
    // Predicated region
    $region30: #{tpu_custom_call.1} parent=1 // pred_check
      _
    $region31: #{tpu_custom_call.1} parent=1 // pred_check_branch
      %53 = sbr.rel (0) target = $region33
    $region32: #{tpu_custom_call.1} parent=1 // pred_region
      _
    $region33: #{tpu_custom_call.1} parent=1 // pred_fallthru
      _
    // Predicated region
    $region34: #{tpu_custom_call.1} parent=1 // pred_check
      _
    $region35: #{tpu_custom_call.1} parent=1 // pred_check_branch
      %55 = sbr.rel (0) target = $region37
    $region36: #{tpu_custom_call.1} parent=1 // pred_region
      _
    $region37: #{tpu_custom_call.1} parent=1 // pred_fallthru
      _
    // Predicated region
    $region38: #{tpu_custom_call.1} parent=1 // pred_check
      _
    $region39: #{tpu_custom_call.1} parent=1 // pred_check_branch
      %57 = sbr.rel (0) target = $region41
    $region40: #{tpu_custom_call.1} parent=1 // pred_region
      %58 = dma.done [#allocation4], 256
    $region41: #{tpu_custom_call.1} parent=1 // pred_fallthru
      _
    // Predicated region
    $region42: #{tpu_custom_call.1} parent=1 // pred_check
      _
    $region43: #{tpu_custom_call.1} parent=1 // pred_check_branch
      %60 = sbr.rel (0) target = $region45
    $region44: #{tpu_custom_call.1} parent=1 // pred_region
      %61 = dma.done [#allocation6], 4096
    $region45: #{tpu_custom_call.1} parent=1 // pred_fallthru
      _
    %v63 = vld [vmem:[%s0] sm:$0xf]
    %v64 = vld [vmem:[#allocation3] sm:$0xff]
    %v65 = vld [vmem:[#allocation3 + $0x8] sm:$0x33]
    %v66 = vld [vmem:[%s1] sm:$0xf]
    %v67 = vld [vmem:[%s3] sm:$0xf]
    %v70 = vunpack.c.l.s4 1983009808
    %v71 = vunpack.c.0.s8 %v70
    %v72 = vlaneseq
    %v73 = vshrl.u32 %v72, 7
    %v74 = vsub.s32 %v71, %v73
    %v75 = vrot.slane %v67, %v74
    %v76 = vcombine.high %v75, %v75
    %vm77 = vcmask 23552
    %v79 = vsel %vm77, %v66, 0
    %vm81 = vcmask 1040384
    %vm82 = vcmask 1041408
    %v83 = vsel %vm81, 4294967295, 65535
    %v84 = vsel %vm82, %v83, 0
    %v86 = vand.u32 %v75, %v84
    %v89 = vand.u32 %v76, %v84
    %91 = vmatprep.subr.bf16.mxu0 0
    %92 = vmatpush1.bf16.msra.mxu0 0
    %93 = vmatprep.subr.bf16.mxu0 0
    %94 = vmatpush1.bf16.msra.mxu0 0
    %95 = vmatprep.subr.bf16.mxu0 0
    %96 = vmatpush1.bf16.msra.mxu0 0
    %97 = vmatprep.subr.bf16.mxu0 0
    %98 = vmatpush1.bf16.msra.mxu0 0
    %99 = vmatprep.subr.bf16.mxu0 0
    %100 = vmatpush1.bf16.msra.mxu0 0
    %101 = vmatprep.subr.bf16.mxu0 0
    %102 = vmatpush1.bf16.msra.mxu0 0
    %103 = vmatprep.subr.bf16.mxu0 0
    %104 = vmatpush1.bf16.msra.mxu0 0
    %105 = vmatprep.subr.bf16.mxu0 %v89
    %106 = vmatpush1.bf16.msra.mxu0 %v86
    %107 = vmatprep.subr.bf16.mxu0 0
    %108 = vmatpush2.bf16.msra.mxu0 0
    %109 = vmatprep.subr.bf16.mxu0 0
    %110 = vmatpush2.bf16.msra.mxu0 0
    %111 = vmatprep.subr.bf16.mxu0 0
    %112 = vmatpush2.bf16.msra.mxu0 0
    %113 = vmatprep.subr.bf16.mxu0 0
    %114 = vmatpush2.bf16.msra.mxu0 0
    %115 = vmatprep.subr.bf16.mxu0 0
    %116 = vmatpush2.bf16.msra.mxu0 0
    %117 = vmatprep.subr.bf16.mxu0 0
    %118 = vmatpush2.bf16.msra.mxu0 0
    %119 = vmatprep.subr.bf16.mxu0 0
    %120 = vmatpush2.bf16.msra.mxu0 0
    %121 = vmatprep.subr.bf16.mxu0 0
    %122 = vmatpush2.bf16.msra.mxu0 0
    %123 = vmatprep.mubr.bf16.mxu0 0
    %124 = vmatmul.mubr.bf16.gmra.mxu0 %v79
    %v125 = vpop.f32.mrf.mxu0
    %v126 = vadd.f32 0.0, %v125
    %v127 = vpop.f32.mrf.mxu0
    %v128 = vadd.f32 0.0, %v127
    %v129 = vpop.f32.mrf.mxu0
    %v130 = vpop.f32.mrf.mxu0
    %131 = vdwg.mxu0
    %v134 = vunpack.c.l.b16 %v64
    %v135 = vunpack.c.h.b16 %v64
    %v136 = vunpack.c.l.b16 %v65
    %v137 = vunpack.c.h.b16 %v65
    %v138 = vpack.c.b16 %v136, %v134
    %v139 = vpack.c.b16 %v137, %v135
    %vm140 = vcmask 89088
    %v142 = vsel %vm140, %v63, 0
    %vm144 = vcmask 1044480
    %vm145 = vcmask 1045504
    %v146 = vsel %vm144, 4294967295, 65535
    %v147 = vsel %vm145, %v146, 0
    %v149 = vand.u32 %v138, %v147
    %v152 = vand.u32 %v139, %v147
    %154 = vmatprep.subr.bf16.mxu0 0
    %155 = vmatpush1.bf16.msra.mxu0 0
    %156 = vmatprep.subr.bf16.mxu0 0
    %157 = vmatpush1.bf16.msra.mxu0 0
    %158 = vmatprep.subr.bf16.mxu0 0
    %159 = vmatpush1.bf16.msra.mxu0 0
    %160 = vmatprep.subr.bf16.mxu0 0
    %161 = vmatpush1.bf16.msra.mxu0 0
    %162 = vmatprep.subr.bf16.mxu0 0
    %163 = vmatpush1.bf16.msra.mxu0 0
    %164 = vmatprep.subr.bf16.mxu0 0
    %165 = vmatpush1.bf16.msra.mxu0 0
    %166 = vmatprep.subr.bf16.mxu0 0
    %167 = vmatpush1.bf16.msra.mxu0 0
    %168 = vmatprep.subr.bf16.mxu0 %v152
    %169 = vmatpush1.bf16.msra.mxu0 %v149
    %170 = vmatprep.subr.bf16.mxu0 0
    %171 = vmatpush2.bf16.msra.mxu0 0
    %172 = vmatprep.subr.bf16.mxu0 0
    %173 = vmatpush2.bf16.msra.mxu0 0
    %174 = vmatprep.subr.bf16.mxu0 0
    %175 = vmatpush2.bf16.msra.mxu0 0
    %176 = vmatprep.subr.bf16.mxu0 0
    %177 = vmatpush2.bf16.msra.mxu0 0
    %178 = vmatprep.subr.bf16.mxu0 0
    %179 = vmatpush2.bf16.msra.mxu0 0
    %180 = vmatprep.subr.bf16.mxu0 0
    %181 = vmatpush2.bf16.msra.mxu0 0
    %182 = vmatprep.subr.bf16.mxu0 0
    %183 = vmatpush2.bf16.msra.mxu0 0
    %184 = vmatprep.subr.bf16.mxu0 0
    %185 = vmatpush2.bf16.msra.mxu0 0
    %186 = vmatprep.mubr.bf16.mxu0 0
    %187 = vmatmul.mubr.bf16.gmra.mxu0 %v142
    %v188 = vpop.f32.mrf.mxu0
    %v189 = vadd.f32 %v126, %v188
    %v190 = vpop.f32.mrf.mxu0
    %v191 = vadd.f32 %v128, %v190
    %v192 = vpop.f32.mrf.mxu0
    %v193 = vpop.f32.mrf.mxu0
    %194 = vdwg.mxu0
    %v195 = vld [vmem:[%s4] sm:$0x3]
    %v197 = vlaneseq
    %v198 = vshrl.u32 %v197, 7
    %v199 = vsub.s32 0, %v198
    %v200 = vrot.slane %v195, %v199
    %v201 = vlaneseq
    %v202 = vshrl.u32 %v201, 7
    %v203 = vsub.s32 1, %v202
    %v204 = vrot.slane %v195, %v203
    %v207 = vadd.f32 %v189, %v200
    %v208 = vadd.f32 %v191, %v204
    %v209 = vmax.f32 %v207, 0.0
    %v210 = vmax.f32 %v208, 0.0
    %v211 = vpack.c.bf16 %v209, %v209
    %v212 = vpack.c.bf16 %v210, %v210
    %v213 = vld [vmem:[#allocation5] sm:$0xff]
    %v214 = vld [vmem:[#allocation5 + $0x8] sm:$0xff]
    %v215 = vld [vmem:[#allocation5 + $0x10] sm:$0xff]
    %v216 = vld [vmem:[#allocation5 + $0x18] sm:$0xff]
    %v217 = vld [vmem:[#allocation5 + $0x20] sm:$0xff]
    %v218 = vld [vmem:[#allocation5 + $0x28] sm:$0xff]
    %v219 = vld [vmem:[#allocation5 + $0x30] sm:$0xff]
    %v220 = vld [vmem:[#allocation5 + $0x38] sm:$0xff]
    %v221 = vld [vmem:[#allocation5 + $0x40] sm:$0xff]
    %v222 = vld [vmem:[#allocation5 + $0x48] sm:$0xff]
    %v223 = vld [vmem:[#allocation5 + $0x50] sm:$0xff]
    %v224 = vld [vmem:[#allocation5 + $0x58] sm:$0xff]
    %v225 = vld [vmem:[#allocation5 + $0x60] sm:$0xff]
    %v226 = vld [vmem:[#allocation5 + $0x68] sm:$0xff]
    %v227 = vld [vmem:[#allocation5 + $0x70] sm:$0xff]
    %v228 = vld [vmem:[#allocation5 + $0x78] sm:$0xff]
    %v229 = vld [vmem:[#allocation5 + $0x80] sm:$0xff]
    %v230 = vld [vmem:[#allocation5 + $0x88] sm:$0xff]
    %v231 = vld [vmem:[#allocation5 + $0x90] sm:$0xff]
    %v232 = vld [vmem:[#allocation5 + $0x98] sm:$0xff]
    %v233 = vld [vmem:[#allocation5 + $0xa0] sm:$0xff]
    %v234 = vld [vmem:[#allocation5 + $0xa8] sm:$0xff]
    %v235 = vld [vmem:[#allocation5 + $0xb0] sm:$0xff]
    %v236 = vld [vmem:[#allocation5 + $0xb8] sm:$0xff]
    %v237 = vld [vmem:[#allocation5 + $0xc0] sm:$0xff]
    %v238 = vld [vmem:[#allocation5 + $0xc8] sm:$0xff]
    %v239 = vld [vmem:[#allocation5 + $0xd0] sm:$0xff]
    %v240 = vld [vmem:[#allocation5 + $0xd8] sm:$0xff]
    %v241 = vld [vmem:[#allocation5 + $0xe0] sm:$0xff]
    %v242 = vld [vmem:[#allocation5 + $0xe8] sm:$0xff]
    %v243 = vld [vmem:[#allocation5 + $0xf0] sm:$0xff]
    %v244 = vld [vmem:[#allocation5 + $0xf8] sm:$0xff]
    %v245 = vld [vmem:[%s6] sm:$0x3]
    %v247 = vlaneseq
    %v248 = vshrl.u32 %v247, 7
    %v249 = vsub.s32 0, %v248
    %v250 = vrot.slane %v245, %v249
    %v251 = vlaneseq
    %v252 = vshrl.u32 %v251, 7
    %v253 = vsub.s32 1, %v252
    %v254 = vrot.slane %v245, %v253
    %v289 = vunpack.c.l.b16 %v213
    %v290 = vunpack.c.h.b16 %v213
    %v291 = vunpack.c.l.b16 %v214
    %v292 = vunpack.c.h.b16 %v214
    %v293 = vunpack.c.l.b16 %v215
    %v294 = vunpack.c.h.b16 %v215
    %v295 = vunpack.c.l.b16 %v216
    %v296 = vunpack.c.h.b16 %v216
    %v297 = vunpack.c.l.b16 %v217
    %v298 = vunpack.c.h.b16 %v217
    %v299 = vunpack.c.l.b16 %v218
    %v300 = vunpack.c.h.b16 %v218
    %v301 = vunpack.c.l.b16 %v219
    %v302 = vunpack.c.h.b16 %v219
    %v303 = vunpack.c.l.b16 %v220
    %v304 = vunpack.c.h.b16 %v220
    %v305 = vunpack.c.l.b16 %v221
    %v306 = vunpack.c.h.b16 %v221
    %v307 = vunpack.c.l.b16 %v222
    %v308 = vunpack.c.h.b16 %v222
    %v309 = vunpack.c.l.b16 %v223
    %v310 = vunpack.c.h.b16 %v223
    %v311 = vunpack.c.l.b16 %v224
    %v312 = vunpack.c.h.b16 %v224
    %v313 = vunpack.c.l.b16 %v225
    %v314 = vunpack.c.h.b16 %v225
    %v315 = vunpack.c.l.b16 %v226
    %v316 = vunpack.c.h.b16 %v226
    %v317 = vunpack.c.l.b16 %v227
    %v318 = vunpack.c.h.b16 %v227
    %v319 = vunpack.c.l.b16 %v228
    %v320 = vunpack.c.h.b16 %v228
    %v321 = vunpack.c.l.b16 %v229
    %v322 = vunpack.c.h.b16 %v229
    %v323 = vunpack.c.l.b16 %v230
    %v324 = vunpack.c.h.b16 %v230
    %v325 = vunpack.c.l.b16 %v231
    %v326 = vunpack.c.h.b16 %v231
    %v327 = vunpack.c.l.b16 %v232
    %v328 = vunpack.c.h.b16 %v232
    %v329 = vunpack.c.l.b16 %v233
    %v330 = vunpack.c.h.b16 %v233
    %v331 = vunpack.c.l.b16 %v234
    %v332 = vunpack.c.h.b16 %v234
    %v333 = vunpack.c.l.b16 %v235
    %v334 = vunpack.c.h.b16 %v235
    %v335 = vunpack.c.l.b16 %v236
    %v336 = vunpack.c.h.b16 %v236
    %v337 = vunpack.c.l.b16 %v237
    %v338 = vunpack.c.h.b16 %v237
    %v339 = vunpack.c.l.b16 %v238
    %v340 = vunpack.c.h.b16 %v238
    %v341 = vunpack.c.l.b16 %v239
    %v342 = vunpack.c.h.b16 %v239
    %v343 = vunpack.c.l.b16 %v240
    %v344 = vunpack.c.h.b16 %v240
    %v345 = vunpack.c.l.b16 %v241
    %v346 = vunpack.c.h.b16 %v241
    %v347 = vunpack.c.l.b16 %v242
    %v348 = vunpack.c.h.b16 %v242
    %v349 = vunpack.c.l.b16 %v243
    %v350 = vunpack.c.h.b16 %v243
    %v351 = vunpack.c.l.b16 %v244
    %v352 = vunpack.c.h.b16 %v244
    %v353 = vpack.c.b16 %v291, %v289
    %v354 = vpack.c.b16 %v292, %v290
    %v355 = vpack.c.b16 %v295, %v293
    %v356 = vpack.c.b16 %v296, %v294
    %v357 = vpack.c.b16 %v299, %v297
    %v358 = vpack.c.b16 %v300, %v298
    %v359 = vpack.c.b16 %v303, %v301
    %v360 = vpack.c.b16 %v304, %v302
    %v361 = vpack.c.b16 %v307, %v305
    %v362 = vpack.c.b16 %v308, %v306
    %v363 = vpack.c.b16 %v311, %v309
    %v364 = vpack.c.b16 %v312, %v310
    %v365 = vpack.c.b16 %v315, %v313
    %v366 = vpack.c.b16 %v316, %v314
    %v367 = vpack.c.b16 %v319, %v317
    %v368 = vpack.c.b16 %v320, %v318
    %v369 = vpack.c.b16 %v323, %v321
    %v370 = vpack.c.b16 %v324, %v322
    %v371 = vpack.c.b16 %v327, %v325
    %v372 = vpack.c.b16 %v328, %v326
    %v373 = vpack.c.b16 %v331, %v329
    %v374 = vpack.c.b16 %v332, %v330
    %v375 = vpack.c.b16 %v335, %v333
    %v376 = vpack.c.b16 %v336, %v334
    %v377 = vpack.c.b16 %v339, %v337
    %v378 = vpack.c.b16 %v340, %v338
    %v379 = vpack.c.b16 %v343, %v341
    %v380 = vpack.c.b16 %v344, %v342
    %v381 = vpack.c.b16 %v347, %v345
    %v382 = vpack.c.b16 %v348, %v346
    %v383 = vpack.c.b16 %v351, %v349
    %v384 = vpack.c.b16 %v352, %v350
    %417 = vmatprep.subr.bf16.mxu0 %v368
    %418 = vmatpush1.bf16.msra.mxu0 %v367
    %419 = vmatprep.subr.bf16.mxu0 %v366
    %420 = vmatpush1.bf16.msra.mxu0 %v365
    %421 = vmatprep.subr.bf16.mxu0 %v364
    %422 = vmatpush1.bf16.msra.mxu0 %v363
    %423 = vmatprep.subr.bf16.mxu0 %v362
    %424 = vmatpush1.bf16.msra.mxu0 %v361
    %425 = vmatprep.subr.bf16.mxu0 %v360
    %426 = vmatpush1.bf16.msra.mxu0 %v359
    %427 = vmatprep.subr.bf16.mxu0 %v358
    %428 = vmatpush1.bf16.msra.mxu0 %v357
    %429 = vmatprep.subr.bf16.mxu0 %v356
    %430 = vmatpush1.bf16.msra.mxu0 %v355
    %431 = vmatprep.subr.bf16.mxu0 %v354
    %432 = vmatpush1.bf16.msra.mxu0 %v353
    %433 = vmatprep.subr.bf16.mxu0 %v384
    %434 = vmatpush2.bf16.msra.mxu0 %v383
    %435 = vmatprep.subr.bf16.mxu0 %v382
    %436 = vmatpush2.bf16.msra.mxu0 %v381
    %437 = vmatprep.subr.bf16.mxu0 %v380
    %438 = vmatpush2.bf16.msra.mxu0 %v379
    %439 = vmatprep.subr.bf16.mxu0 %v378
    %440 = vmatpush2.bf16.msra.mxu0 %v377
    %441 = vmatprep.subr.bf16.mxu0 %v376
    %442 = vmatpush2.bf16.msra.mxu0 %v375
    %443 = vmatprep.subr.bf16.mxu0 %v374
    %444 = vmatpush2.bf16.msra.mxu0 %v373
    %445 = vmatprep.subr.bf16.mxu0 %v372
    %446 = vmatpush2.bf16.msra.mxu0 %v371
    %447 = vmatprep.subr.bf16.mxu0 %v370
    %448 = vmatpush2.bf16.msra.mxu0 %v369
    %449 = vmatprep.mubr.bf16.mxu0 %v212
    %450 = vmatmul.mubr.bf16.gmra.mxu0 %v211
    %v451 = vpop.f32.mrf.mxu0
    %v452 = vadd.f32 %v250, %v451
    %v453 = vpop.f32.mrf.mxu0
    %v454 = vadd.f32 %v254, %v453
    %v455 = vpop.f32.mrf.mxu0
    %v456 = vpop.f32.mrf.mxu0
    %457 = vdwg.mxu0
    %v458 = vmax.f32 %v452, 0.0
    %v459 = vmax.f32 %v454, 0.0
    %v460 = vld [vmem:[%s7] sm:$0x3]
    %v462 = vlaneseq
    %v463 = vshrl.u32 %v462, 7
    %v464 = vsub.s32 0, %v463
    %v465 = vrot.slane %v460, %v464
    %v466 = vlaneseq
    %v467 = vshrl.u32 %v466, 7
    %v468 = vsub.s32 1, %v467
    %v469 = vrot.slane %v460, %v468
    %v472 = vmul.f32 %v458, %v465
    %v473 = vmul.f32 %v459, %v469
    %v474 = vadd.f32 %v472, %v473
    %475 = vadd.xlane.f32.xlu0 %v474
    %v476 = vpop.xlane.xlu0 %475
    %v477 = vld [vmem:[#allocation2] sm:$0x1]
    %v479 = vlaneseq
    %v480 = vshrl.u32 %v479, 7
    %v481 = vsub.s32 0, %v480
    %v482 = vrot.slane %v477, %v481
    %v484 = vadd.f32 %v476, %v482
    %vm485 = vcmask 7168
    %486 = vst.msk [vmem:[%s9] sm:$0xff] %vm485, %v484
    // Predicated region
    $region46: #{tpu_custom_call.1} parent=1 // pred_check
      _
    $region47: #{tpu_custom_call.1} parent=1 // pred_check_branch
      %488 = sbr.rel (0) target = $region49
    $region48: #{tpu_custom_call.1} parent=1 // pred_region
      _
    $region49: #{tpu_custom_call.1} parent=1 // pred_fallthru
      _
    // Predicated region
    $region50: #{tpu_custom_call.1} parent=1 // pred_check
      _
    $region51: #{tpu_custom_call.1} parent=1 // pred_check_branch
      %490 = sbr.rel (0) target = $region53
    $region52: #{tpu_custom_call.1} parent=1 // pred_region
      _
    $region53: #{tpu_custom_call.1} parent=1 // pred_fallthru
      _
    %491 = vsyncpa [#allocation4], 1
    %492 = vsyncpa [#allocation6], 1

</llo_original>
